<compile_context>
chip_gen: v7x
topology: tpu7x:2x2x1
jax: 0.10.0
libtpu: 0.0.40
codegen_flags: <defaults>
</compile_context>

<pallas_src>
import jax
import jax.numpy as jnp
from jax.experimental import pallas as pl
from jax.experimental.pallas import tpu as pltpu

_MIB = 1024 * 1024
_VMEM_BUDGET = 48 * _MIB          # <= 64 MiB physical on v7x, ample on v5e/v6e


def _round_up(n, m):
    return ((n + m - 1) // m) * m


def _pad_dim(d):
    # 128-pad small dims; 256-pad larger ones so K/N fill the 256-wide MXU
    # tiles on v6e/v7x (padding 64 -> 256 would just 4x the FLOPs).
    return _round_up(d, 128) if d <= 128 else _round_up(d, 256)


# ----------------------------------------------------------------------------
# Kernel
# ----------------------------------------------------------------------------
def _vae_kernel(x_ref, eps_ref,
                w1_ref, b1_ref, wml_ref, bml_ref,
                wd1_ref, bd1_ref, wd2_ref, bd2_ref,
                xrec_ref, ml_ref):
    f32, bf16 = jnp.float32, jnp.bfloat16
    lat_p = eps_ref.shape[-1]

    x = x_ref[...]                                            # bf16 [TB, In_p]

    # --- Encoder ---
    h = jnp.dot(x, w1_ref[...], preferred_element_type=f32) + b1_ref[...]
    h = jnp.maximum(h, 0.0)                                   # ReLU (f32, VPU)

    # Fused mu|logvar head: one wide matmul, stored as ONE lane-dense output.
    ml = jnp.dot(h.astype(bf16), wml_ref[...],
                 preferred_element_type=f32) + bml_ref[...]
    ml_ref[...] = ml

    mu = ml[:, :lat_p]             # 128-aligned static lane slices
    log_var = ml[:, lat_p:]

    # --- Reparameterize: z = mu + eps * exp(0.5 * log_var) (f32 EUP/VPU) ---
    z = mu + eps_ref[...].astype(f32) * jnp.exp(0.5 * log_var)

    # --- Decoder ---
    h2 = jnp.dot(z.astype(bf16), wd1_ref[...],
                 preferred_element_type=f32) + bd1_ref[...]
    h2 = jnp.maximum(h2, 0.0)
    xrec_ref[...] = jnp.dot(h2.astype(bf16), wd2_ref[...],
                            preferred_element_type=f32) + bd2_ref[...]


# ----------------------------------------------------------------------------
# One-time parameter / input preparation (NOT in the jitted hot path)
# ----------------------------------------------------------------------------
def prepare_params(params):
    """Transpose to [in, out], fuse mu|logvar weights into one head, zero-pad
    every feature dim, cast matmul weights to bf16 (biases stay f32)."""
    in_dim = params["enc_fc1_w"].shape[1]
    hid = params["enc_fc1_w"].shape[0]
    lat = params["enc_fc_mu_w"].shape[0]
    out_dim = params["dec_fc2_w"].shape[0]

    In_p, H_p, L_p, Out_p = (_pad_dim(in_dim), _pad_dim(hid),
                             _pad_dim(lat), _pad_dim(out_dim))

    def pad_w(w_t, rows, cols):   # w_t is [in, out]
        return (jnp.zeros((rows, cols), jnp.float32)
                .at[:w_t.shape[0], :w_t.shape[1]].set(w_t)).astype(jnp.bfloat16)

    def pad_b(b, cols):
        return jnp.zeros((1, cols), jnp.float32).at[0, :b.shape[0]].set(b)

    w1 = pad_w(params["enc_fc1_w"].T, In_p, H_p)
    b1 = pad_b(params["enc_fc1_b"], H_p)

    # Fused mu|logvar head: [H_p, 2*L_p] (mu cols [0,L_p), logvar [L_p,2*L_p)).
    wml = jnp.zeros((H_p, 2 * L_p), jnp.float32)
    wml = wml.at[:hid, :lat].set(params["enc_fc_mu_w"].T)
    wml = wml.at[:hid, L_p:L_p + lat].set(params["enc_fc_logvar_w"].T)
    wml = wml.astype(jnp.bfloat16)
    bml = jnp.zeros((1, 2 * L_p), jnp.float32)
    bml = bml.at[0, :lat].set(params["enc_fc_mu_b"])
    bml = bml.at[0, L_p:L_p + lat].set(params["enc_fc_logvar_b"])

    wd1 = pad_w(params["dec_fc1_w"].T, L_p, H_p)
    bd1 = pad_b(params["dec_fc1_b"], H_p)
    wd2 = pad_w(params["dec_fc2_w"].T, H_p, Out_p)
    bd2 = pad_b(params["dec_fc2_b"], Out_p)

    return dict(w1=w1, b1=b1, wml=wml, bml=bml,
                wd1=wd1, bd1=bd1, wd2=wd2, bd2=bd2)


def _padded_batch(B):
    B_pad = _round_up(max(B, 1), 128)
    if B_pad > 128:
        B_pad = _round_up(B_pad, 256)   # even 128-tile count -> >=2 grid steps
    return B_pad


def pad_inputs(x, eps, prepped):
    """Pad/cast activations once, outside the hot path (like the weights)."""
    In_p = prepped["w1"].shape[0]
    L_p = prepped["wd1"].shape[0]
    B = x.shape[0]
    B_pad = _padded_batch(B)
    x_p = (jnp.zeros((B_pad, In_p), jnp.bfloat16)
           .at[:B, :x.shape[1]].set(x.astype(jnp.bfloat16)))
    eps_p = (jnp.zeros((B_pad, L_p), jnp.bfloat16)
             .at[:B, :eps.shape[1]].set(eps.astype(jnp.bfloat16)))
    return x_p, eps_p


def _choose_tb(B_pad, In_p, L_p, Out_p, weight_bytes):
    """Largest 128-multiple tile (cap 1024) giving >=2 grid steps when
    B_pad > 128, subject to the VMEM budget (weights counted double-buffered
    for safety)."""
    def act_bytes(tb):
        # double-buffered activation streams: x+eps bf16 in, xrec+ml f32 out
        return 2 * tb * (2 * In_p + 2 * L_p + 4 * Out_p + 4 * 2 * L_p)

    def fits(tb):
        return act_bytes(tb) + 2 * weight_bytes + 2 * _MIB <= _VMEM_BUDGET

    if B_pad <= 128:
        return B_pad
    for cand in (1024, 512, 256, 128):
        if B_pad % cand == 0 and B_pad // cand >= 2 and fits(cand):
            return cand
    return 128


# ----------------------------------------------------------------------------
# Hot path: fused VAE forward on pre-padded activations
# ----------------------------------------------------------------------------
@jax.jit
def vae_forward(x_p, eps_p, prepped):
    """Returns (x_recon_padded [B_pad, Out_p], mu|logvar_padded [B_pad, 2*L_p])."""
    w1, b1 = prepped["w1"], prepped["b1"]
    wml, bml = prepped["wml"], prepped["bml"]
    wd1, bd1 = prepped["wd1"], prepped["bd1"]
    wd2, bd2 = prepped["wd2"], prepped["bd2"]

    B_pad, In_p = x_p.shape
    H_p = w1.shape[1]
    L_p = wd1.shape[0]
    Out_p = wd2.shape[1]

    weights = (w1, b1, wml, bml, wd1, bd1, wd2, bd2)
    weight_bytes = sum(int(w.size) * w.dtype.itemsize for w in weights)

    TB = _choose_tb(B_pad, In_p, L_p, Out_p, weight_bytes)
    grid = (B_pad // TB,)

    def resident(arr):
        # Constant index_map + single buffer: stays VMEM-resident across the
        # grid without a second (never used) pipeline buffer.
        return pl.BlockSpec(arr.shape, lambda i: (0, 0),
                            pipeline_mode=pl.Buffered(1))

    def batched(cols):
        return pl.BlockSpec((TB, cols), lambda i: (i, 0))

    in_specs = [batched(In_p), batched(L_p)] + [resident(w) for w in weights]
    out_specs = (batched(Out_p), batched(2 * L_p))
    out_shape = (jax.ShapeDtypeStruct((B_pad, Out_p), jnp.float32),   # x_recon
                 jax.ShapeDtypeStruct((B_pad, 2 * L_p), jnp.float32)) # mu|logvar

    flops = 2 * B_pad * (In_p * H_p + H_p * 2 * L_p + L_p * H_p + H_p * Out_p)
    bytes_accessed = (int(x_p.size) * 2 + int(eps_p.size) * 2 + weight_bytes
                      + (B_pad * Out_p + B_pad * 2 * L_p) * 4)
    cost = pl.CostEstimate(flops=int(flops),
                           transcendentals=int(B_pad * L_p),
                           bytes_accessed=int(bytes_accessed))

    act_vmem = 2 * TB * (2 * In_p + 2 * L_p + 4 * Out_p + 4 * 2 * L_p)
    vmem_limit = min(_VMEM_BUDGET,
                     max(32 * _MIB, act_vmem + 2 * weight_bytes + 4 * _MIB))

    return pl.pallas_call(
        _vae_kernel,
        grid=grid,
        in_specs=in_specs,
        out_specs=out_specs,
        out_shape=out_shape,
        compiler_params=pltpu.CompilerParams(
            dimension_semantics=("parallel",),      # batch shards across TCs
            vmem_limit_bytes=int(vmem_limit)),
        cost_estimate=cost,
    )(x_p, eps_p, *weights)


def vae_apply(x, eps, prepped, latent_dim, output_dim):
    """Convenience wrapper with the original (unpadded) module semantics."""
    B = x.shape[0]
    L_p = prepped["wd1"].shape[0]
    x_p, eps_p = pad_inputs(x, eps, prepped)
    xrec_p, ml_p = vae_forward(x_p, eps_p, prepped)
    return (xrec_p[:B, :output_dim],
            ml_p[:B, :latent_dim],
            ml_p[:B, L_p:L_p + latent_dim])


# ----------------------------------------------------------------------------
# Init + pure-JAX reference (mirrors kernel numerics)
# ----------------------------------------------------------------------------
def init_params(key, input_dim, hidden_dim, latent_dim, output_dim):
    """Deterministic init mimicking nn.Linear default (U(-1/sqrt(fan_in), +))."""
    def linear(k, fan_out, fan_in):
        kw, kb = jax.random.split(k)
        bound = 1.0 / jnp.sqrt(fan_in)
        w = jax.random.uniform(kw, (fan_out, fan_in), jnp.float32, -bound, bound)
        b = jax.random.uniform(kb, (fan_out,), jnp.float32, -bound, bound)
        return w, b

    keys = jax.random.split(key, 5)
    p = {}
    p["enc_fc1_w"], p["enc_fc1_b"] = linear(keys[0], hidden_dim, input_dim)
    p["enc_fc_mu_w"], p["enc_fc_mu_b"] = linear(keys[1], latent_dim, hidden_dim)
    p["enc_fc_logvar_w"], p["enc_fc_logvar_b"] = linear(keys[2], latent_dim, hidden_dim)
    p["dec_fc1_w"], p["dec_fc1_b"] = linear(keys[3], hidden_dim, latent_dim)
    p["dec_fc2_w"], p["dec_fc2_b"] = linear(keys[4], output_dim, hidden_dim)
    return p


def vae_forward_ref(x, eps, params):
    """Pure-JAX reference mirroring the kernel numerics: bf16 matmul operands,
    f32 accumulation, f32 elementwise math, bf16-rounded eps."""
    bf16, f32 = jnp.bfloat16, jnp.float32

    def lin(a, w, b):
        return jnp.dot(a.astype(bf16), w.T.astype(bf16),
                       preferred_element_type=f32) + b

    h = jax.nn.relu(lin(x, params["enc_fc1_w"], params["enc_fc1_b"]))
    mu = lin(h, params["enc_fc_mu_w"], params["enc_fc_mu_b"])
    lv = lin(h, params["enc_fc_logvar_w"], params["enc_fc_logvar_b"])
    eps_q = eps.astype(bf16).astype(f32)
    z = mu + eps_q * jnp.exp(0.5 * lv)
    h2 = jax.nn.relu(lin(z, params["dec_fc1_w"], params["dec_fc1_b"]))
    xr = lin(h2, params["dec_fc2_w"], params["dec_fc2_b"])
    return xr, mu, lv


if __name__ == "__main__":
    # Small shapes consistent with the module's MLP-VAE forward.
    B, input_dim, hidden_dim, latent_dim, output_dim = 8, 32, 64, 16, 32

    key = jax.random.PRNGKey(0)
    k_params, k_x, k_eps = jax.random.split(key, 3)

    params = init_params(k_params, input_dim, hidden_dim, latent_dim, output_dim)
    prepped = prepare_params(params)     # one-time transpose/fuse/pad/bf16

    x = jax.random.normal(k_x, (B, input_dim), jnp.float32)
    # eps plays the role of torch.randn_like(std) in reparameterize().
    eps = jax.random.normal(k_eps, (B, latent_dim), jnp.float32)

    # Hot path: pad once (outside any training loop), run the fused kernel on
    # padded activations, slice the padded outputs back.
    x_p, eps_p = pad_inputs(x, eps, prepped)
    xrec_p, ml_p = vae_forward(x_p, eps_p, prepped)
    jax.block_until_ready((xrec_p, ml_p))

    L_p = prepped["wd1"].shape[0]
    x_recon = xrec_p[:B, :output_dim]
    mu = ml_p[:B, :latent_dim]
    log_var = ml_p[:B, L_p:L_p + latent_dim]

    assert x_recon.shape == (B, output_dim)
    assert mu.shape == (B, latent_dim) and log_var.shape == (B, latent_dim)

    xr_ref, mu_ref, lv_ref = vae_forward_ref(x, eps, params)
    assert jnp.allclose(x_recon, xr_ref, atol=1e-2, rtol=1e-2)
    assert jnp.allclose(mu, mu_ref, atol=1e-2, rtol=1e-2)
    assert jnp.allclose(log_var, lv_ref, atol=1e-2, rtol=1e-2)

    print("KERNEL_OK")
</pallas_src>

<mosaic_0001>
module attributes {stable_mosaic.version = 11 : i64} {
  func.func @_vae_kernel(%arg0: i32, %arg1: memref<128x128xbf16, #tpu.memory_space<vmem>>, %arg2: memref<128x128xbf16, #tpu.memory_space<vmem>>, %arg3: memref<128x128xbf16, #tpu.memory_space<vmem>>, %arg4: memref<1x128xf32, #tpu.memory_space<vmem>>, %arg5: memref<128x256xbf16, #tpu.memory_space<vmem>>, %arg6: memref<1x256xf32, #tpu.memory_space<vmem>>, %arg7: memref<128x128xbf16, #tpu.memory_space<vmem>>, %arg8: memref<1x128xf32, #tpu.memory_space<vmem>>, %arg9: memref<128x128xbf16, #tpu.memory_space<vmem>>, %arg10: memref<1x128xf32, #tpu.memory_space<vmem>>, %arg11: memref<128x128xf32, #tpu.memory_space<vmem>>, %arg12: memref<128x256xf32, #tpu.memory_space<vmem>>) attributes {dimension_semantics = [#tpu.dimension_semantics<parallel>], iteration_bounds = array<i64: 1>, scalar_prefetch = 0 : i64, scratch_operands = 0 : i64, tpu.core_type = #tpu.core_type<tc>, window_params = [{transform_indices = @transform_0, window_bounds = array<i64: 128, 128>}, {transform_indices = @transform_1, window_bounds = array<i64: 128, 128>}, {pipeline_mode = #tpu.pipeline_mode<synchronous>, transform_indices = @transform_2, window_bounds = array<i64: 128, 128>}, {pipeline_mode = #tpu.pipeline_mode<synchronous>, transform_indices = @transform_3, window_bounds = array<i64: 1, 128>}, {pipeline_mode = #tpu.pipeline_mode<synchronous>, transform_indices = @transform_4, window_bounds = array<i64: 128, 256>}, {pipeline_mode = #tpu.pipeline_mode<synchronous>, transform_indices = @transform_5, window_bounds = array<i64: 1, 256>}, {pipeline_mode = #tpu.pipeline_mode<synchronous>, transform_indices = @transform_6, window_bounds = array<i64: 128, 128>}, {pipeline_mode = #tpu.pipeline_mode<synchronous>, transform_indices = @transform_7, window_bounds = array<i64: 1, 128>}, {pipeline_mode = #tpu.pipeline_mode<synchronous>, transform_indices = @transform_8, window_bounds = array<i64: 128, 128>}, {pipeline_mode = #tpu.pipeline_mode<synchronous>, transform_indices = @transform_9, window_bounds = array<i64: 1, 128>}, {transform_indices = @transform_10, window_bounds = array<i64: 128, 128>}, {transform_indices = @transform_11, window_bounds = array<i64: 128, 256>}]} {
    %c0 = arith.constant 0 : index
    %c0_0 = arith.constant 0 : index
    %0 = vector.load %arg1[%c0, %c0_0] : memref<128x128xbf16, #tpu.memory_space<vmem>>, vector<128x128xbf16>
    %c0_1 = arith.constant 0 : index
    %c0_2 = arith.constant 0 : index
    %1 = vector.load %arg3[%c0_1, %c0_2] : memref<128x128xbf16, #tpu.memory_space<vmem>>, vector<128x128xbf16>
    %cst = arith.constant dense<0.000000e+00> : vector<128x128xf32>
    %2 = tpu.matmul %0, %1, %cst {dimension_numbers = #tpu.dot_dimension_numbers<[1], [0], [0], [1], [0, 0, 1, 1], [], []>} : vector<128x128xbf16>, vector<128x128xbf16>, vector<128x128xf32> -> vector<128x128xf32>
    %c0_3 = arith.constant 0 : index
    %c0_4 = arith.constant 0 : index
    %3 = vector.load %arg4[%c0_3, %c0_4] : memref<1x128xf32, #tpu.memory_space<vmem>>, vector<1x128xf32>
    %4 = vector.broadcast %3 : vector<1x128xf32> to vector<128x128xf32>
    %5 = arith.addf %2, %4 : vector<128x128xf32>
    %cst_5 = arith.constant 0.000000e+00 : f32
    %6 = vector.broadcast %cst_5 : f32 to vector<128x128xf32>
    %7 = arith.maximumf %5, %6 : vector<128x128xf32>
    %8 = arith.truncf %7 : vector<128x128xf32> to vector<128x128xbf16>
    %c0_6 = arith.constant 0 : index
    %c0_7 = arith.constant 0 : index
    %9 = vector.load %arg5[%c0_6, %c0_7] : memref<128x256xbf16, #tpu.memory_space<vmem>>, vector<128x256xbf16>
    %cst_8 = arith.constant dense<0.000000e+00> : vector<128x256xf32>
    %10 = tpu.matmul %8, %9, %cst_8 {dimension_numbers = #tpu.dot_dimension_numbers<[1], [0], [0], [1], [0, 0, 1, 1], [], []>} : vector<128x128xbf16>, vector<128x256xbf16>, vector<128x256xf32> -> vector<128x256xf32>
    %c0_9 = arith.constant 0 : index
    %c0_10 = arith.constant 0 : index
    %11 = vector.load %arg6[%c0_9, %c0_10] : memref<1x256xf32, #tpu.memory_space<vmem>>, vector<1x256xf32>
    %12 = vector.broadcast %11 : vector<1x256xf32> to vector<128x256xf32>
    %13 = arith.addf %10, %12 : vector<128x256xf32>
    %c0_11 = arith.constant 0 : index
    %c0_12 = arith.constant 0 : index
    %14 = vector.load %arg12[%c0_11, %c0_12] : memref<128x256xf32, #tpu.memory_space<vmem>>, vector<128x256xf32>
    tpu.vector_store %arg12[%c0_11, %c0_12], %13 {strides = array<i32>} : memref<128x256xf32, #tpu.memory_space<vmem>>, vector<128x256xf32>,
    %15 = vector.extract_strided_slice %13 {offsets = [0, 0], sizes = [128, 128], strides = [1, 1]} : vector<128x256xf32> to vector<128x128xf32>
    %16 = vector.extract_strided_slice %13 {offsets = [0, 128], sizes = [128, 128], strides = [1, 1]} : vector<128x256xf32> to vector<128x128xf32>
    %c0_13 = arith.constant 0 : index
    %c0_14 = arith.constant 0 : index
    %17 = vector.load %arg2[%c0_13, %c0_14] : memref<128x128xbf16, #tpu.memory_space<vmem>>, vector<128x128xbf16>
    %18 = arith.extf %17 : vector<128x128xbf16> to vector<128x128xf32>
    %cst_15 = arith.constant 5.000000e-01 : f32
    %19 = vector.broadcast %cst_15 : f32 to vector<128x128xf32>
    %20 = arith.mulf %19, %16 : vector<128x128xf32>
    %21 = math.exp %20 : vector<128x128xf32>
    %22 = arith.mulf %18, %21 : vector<128x128xf32>
    %23 = arith.addf %15, %22 : vector<128x128xf32>
    %24 = arith.truncf %23 : vector<128x128xf32> to vector<128x128xbf16>
    %c0_16 = arith.constant 0 : index
    %c0_17 = arith.constant 0 : index
    %25 = vector.load %arg7[%c0_16, %c0_17] : memref<128x128xbf16, #tpu.memory_space<vmem>>, vector<128x128xbf16>
    %cst_18 = arith.constant dense<0.000000e+00> : vector<128x128xf32>
    %26 = tpu.matmul %24, %25, %cst_18 {dimension_numbers = #tpu.dot_dimension_numbers<[1], [0], [0], [1], [0, 0, 1, 1], [], []>} : vector<128x128xbf16>, vector<128x128xbf16>, vector<128x128xf32> -> vector<128x128xf32>
    %c0_19 = arith.constant 0 : index
    %c0_20 = arith.constant 0 : index
    %27 = vector.load %arg8[%c0_19, %c0_20] : memref<1x128xf32, #tpu.memory_space<vmem>>, vector<1x128xf32>
    %28 = vector.broadcast %27 : vector<1x128xf32> to vector<128x128xf32>
    %29 = arith.addf %26, %28 : vector<128x128xf32>
    %cst_21 = arith.constant 0.000000e+00 : f32
    %30 = vector.broadcast %cst_21 : f32 to vector<128x128xf32>
    %31 = arith.maximumf %29, %30 : vector<128x128xf32>
    %32 = arith.truncf %31 : vector<128x128xf32> to vector<128x128xbf16>
    %c0_22 = arith.constant 0 : index
    %c0_23 = arith.constant 0 : index
    %33 = vector.load %arg9[%c0_22, %c0_23] : memref<128x128xbf16, #tpu.memory_space<vmem>>, vector<128x128xbf16>
    %cst_24 = arith.constant dense<0.000000e+00> : vector<128x128xf32>
    %34 = tpu.matmul %32, %33, %cst_24 {dimension_numbers = #tpu.dot_dimension_numbers<[1], [0], [0], [1], [0, 0, 1, 1], [], []>} : vector<128x128xbf16>, vector<128x128xbf16>, vector<128x128xf32> -> vector<128x128xf32>
    %c0_25 = arith.constant 0 : index
    %c0_26 = arith.constant 0 : index
    %35 = vector.load %arg10[%c0_25, %c0_26] : memref<1x128xf32, #tpu.memory_space<vmem>>, vector<1x128xf32>
    %36 = vector.broadcast %35 : vector<1x128xf32> to vector<128x128xf32>
    %37 = arith.addf %34, %36 : vector<128x128xf32>
    %c0_27 = arith.constant 0 : index
    %c0_28 = arith.constant 0 : index
    %38 = vector.load %arg11[%c0_27, %c0_28] : memref<128x128xf32, #tpu.memory_space<vmem>>, vector<128x128xf32>
    tpu.vector_store %arg11[%c0_27, %c0_28], %37 {strides = array<i32>} : memref<128x128xf32, #tpu.memory_space<vmem>>, vector<128x128xf32>,
    return
  }
  func.func @transform_0(%arg0: i32) -> (i32, i32) {
    %c0_i32 = arith.constant 0 : i32
    %c0_i32_0 = arith.constant 0 : i32
    return %arg0, %c0_i32 : i32, i32
  }
  func.func @transform_1(%arg0: i32) -> (i32, i32) {
    %c0_i32 = arith.constant 0 : i32
    %c0_i32_0 = arith.constant 0 : i32
    return %arg0, %c0_i32 : i32, i32
  }
  func.func @transform_2(%arg0: i32) -> (i32, i32) {
    %c0_i32 = arith.constant 0 : i32
    %c0_i32_0 = arith.constant 0 : i32
    %c0_i32_1 = arith.constant 0 : i32
    return %c0_i32, %c0_i32_0 : i32, i32
  }
  func.func @transform_3(%arg0: i32) -> (i32, i32) {
    %c0_i32 = arith.constant 0 : i32
    %c0_i32_0 = arith.constant 0 : i32
    %c0_i32_1 = arith.constant 0 : i32
    return %c0_i32, %c0_i32_0 : i32, i32
  }
  func.func @transform_4(%arg0: i32) -> (i32, i32) {
    %c0_i32 = arith.constant 0 : i32
    %c0_i32_0 = arith.constant 0 : i32
    %c0_i32_1 = arith.constant 0 : i32
    return %c0_i32, %c0_i32_0 : i32, i32
  }
  func.func @transform_5(%arg0: i32) -> (i32, i32) {
    %c0_i32 = arith.constant 0 : i32
    %c0_i32_0 = arith.constant 0 : i32
    %c0_i32_1 = arith.constant 0 : i32
    return %c0_i32, %c0_i32_0 : i32, i32
  }
  func.func @transform_6(%arg0: i32) -> (i32, i32) {
    %c0_i32 = arith.constant 0 : i32
    %c0_i32_0 = arith.constant 0 : i32
    %c0_i32_1 = arith.constant 0 : i32
    return %c0_i32, %c0_i32_0 : i32, i32
  }
  func.func @transform_7(%arg0: i32) -> (i32, i32) {
    %c0_i32 = arith.constant 0 : i32
    %c0_i32_0 = arith.constant 0 : i32
    %c0_i32_1 = arith.constant 0 : i32
    return %c0_i32, %c0_i32_0 : i32, i32
  }
  func.func @transform_8(%arg0: i32) -> (i32, i32) {
    %c0_i32 = arith.constant 0 : i32
    %c0_i32_0 = arith.constant 0 : i32
    %c0_i32_1 = arith.constant 0 : i32
    return %c0_i32, %c0_i32_0 : i32, i32
  }
  func.func @transform_9(%arg0: i32) -> (i32, i32) {
    %c0_i32 = arith.constant 0 : i32
    %c0_i32_0 = arith.constant 0 : i32
    %c0_i32_1 = arith.constant 0 : i32
    return %c0_i32, %c0_i32_0 : i32, i32
  }
  func.func @transform_10(%arg0: i32) -> (i32, i32) {
    %c0_i32 = arith.constant 0 : i32
    %c0_i32_0 = arith.constant 0 : i32
    return %arg0, %c0_i32 : i32, i32
  }
  func.func @transform_11(%arg0: i32) -> (i32, i32) {
    %c0_i32 = arith.constant 0 : i32
    %c0_i32_0 = arith.constant 0 : i32
    return %arg0, %c0_i32 : i32, i32
  }
}

</mosaic_0001>

<llo_original>
// kernel: vae_forward.1
$region0: #{vae_forward.1}
  #allocation0 [shape = 'u32[]', space=smem, size = 0x4, offset = 0x4, fixed_abs, tag = 'smem constant byte address 0x4 - core index']
  #allocation1 [shape = 'u32[144,128]{1,0:T(1,128)}', space=vmem, size = 0x12000, scoped, tag = 'internal scratch']
  %s0 = inlined_call_operand.hbm [shape: bf16[128,128], index: 0, kind: input, shape index: {}]
  %s1 = inlined_call_operand.hbm [shape: bf16[128,128], index: 1, kind: input, shape index: {}]
  %s2 = inlined_call_operand.hbm [shape: bf16[128,128], index: 2, kind: input, shape index: {}]
  %s3 = inlined_call_operand.vmem [shape: f32[1,128], index: 3, kind: input, shape index: {}]
  %s4 = inlined_call_operand.hbm [shape: bf16[128,256], index: 4, kind: input, shape index: {}]
  %s5 = inlined_call_operand.vmem [shape: f32[1,256], index: 5, kind: input, shape index: {}]
  %s6 = inlined_call_operand.hbm [shape: bf16[128,128], index: 6, kind: input, shape index: {}]
  %s7 = inlined_call_operand.vmem [shape: f32[1,128], index: 7, kind: input, shape index: {}]
  %s8 = inlined_call_operand.hbm [shape: bf16[128,128], index: 8, kind: input, shape index: {}]
  %s9 = inlined_call_operand.vmem [shape: f32[1,128], index: 9, kind: input, shape index: {}]
  %s10 = inlined_call_operand.hbm [shape: f32[128,128], index: 10, kind: output, shape index: {0}]
  %s11 = inlined_call_operand.hbm [shape: f32[128,256], index: 11, kind: output, shape index: {1}]
  %12 = xla_tuple %s10, %s11
  %s13 = sld [smem:[#allocation0]]
  $region82: #{vae_forward.1} parent=0
    _
  %s15 = ssub.s32 1, %s13
  %s16 = scalar_select 0, %s15, %s13
  $region1: #{vae_forward.1} parent=0
    #allocation2 [shape = 'u8[32768]{0}', space=vmem, size = 0x8000, scoped, tag = 'input window, operand 0, single buffered']
    #allocation3 [shape = 's32[1]{0}', space=sflag, size = 0x4, scoped, tag = 'scoped memory for vae_forward.1']
    #allocation4 [shape = 's32[1]{0}', space=sflag, size = 0x4, scoped, tag = 'scoped memory for vae_forward.1']
    #allocation5 [shape = 'u8[32768]{0}', space=vmem, size = 0x8000, scoped, tag = 'input window, operand 1, single buffered']
    #allocation6 [shape = 's32[1]{0}', space=sflag, size = 0x4, scoped, tag = 'scoped memory for vae_forward.1']
    #allocation7 [shape = 'u8[32768]{0}', space=vmem, size = 0x8000, scoped, tag = 'input window, operand 2, single buffered']
    #allocation8 [shape = 'u8[65536]{0}', space=vmem, size = 0x10000, scoped, tag = 'input window, operand 4, single buffered']
    #allocation9 [shape = 's32[1]{0}', space=sflag, size = 0x4, scoped, tag = 'scoped memory for vae_forward.1']
    #allocation10 [shape = 'u8[32768]{0}', space=vmem, size = 0x8000, scoped, tag = 'input window, operand 6, single buffered']
    #allocation11 [shape = 'u8[32768]{0}', space=vmem, size = 0x8000, scoped, tag = 'input window, operand 8, single buffered']
    #allocation12 [shape = 's32[1]{0}', space=sflag, size = 0x4, scoped, tag = 'scoped memory for vae_forward.1']
    #allocation13 [shape = 'u8[65536]{0}', space=vmem, size = 0x10000, scoped, tag = 'output window, operand 0, single buffered']
    #allocation14 [shape = 'u8[131072]{0}', space=vmem, size = 0x20000, scoped, tag = 'output window, operand 1, single buffered']
    #allocation15 [shape = 's32[1]{0}', space=sflag, size = 0x4, scoped, tag = 'scoped memory for vae_forward.1']
    %17 = vsyncpa [#allocation3], 0
    %18 = vsyncpa [#allocation6], 0
    %19 = vsyncpa [#allocation9], 0
    %20 = vsyncpa [#allocation12], 0
    %21 = vsyncpa [#allocation4], 0
    %22 = vsyncpa [#allocation15], 0
    // Predicated region
    $region2: #{vae_forward.1} parent=1 // pred_check
      _
    $region3: #{vae_forward.1} parent=1 // pred_check_branch
      %24 = sbr.rel (0) target = $region5
    $region4: #{vae_forward.1} parent=1 // pred_region
      %s26 = ssub.s32 1024, 1024
      %27 = vsyncadd [#allocation3], %s26
      %s28 = sshll.u32 [#allocation2], 4
      %s29 = int_to_ptr.vmem [resolvable:$true] %s28
      %34 = dma.hbm_to_vmem [thread:$0]  %s0, 1024, %s29, [#allocation3], 64, 64, 4
    $region5: #{vae_forward.1} parent=1 // pred_fallthru
      _
    // Predicated region
    $region6: #{vae_forward.1} parent=1 // pred_check
      _
    $region7: #{vae_forward.1} parent=1 // pred_check_branch
      %36 = sbr.rel (0) target = $region9
    $region8: #{vae_forward.1} parent=1 // pred_region
      %s38 = ssub.s32 1024, 1024
      %39 = vsyncadd [#allocation6], %s38
      %s40 = sshll.u32 [#allocation5], 4
      %s41 = int_to_ptr.vmem [resolvable:$true] %s40
      %46 = dma.hbm_to_vmem [thread:$0]  %s1, 1024, %s41, [#allocation6], 64, 64, 4
    $region9: #{vae_forward.1} parent=1 // pred_fallthru
      _
    // Predicated region
    $region10: #{vae_forward.1} parent=1 // pred_check
      _
    $region11: #{vae_forward.1} parent=1 // pred_check_branch
      %48 = sbr.rel (0) target = $region13
    $region12: #{vae_forward.1} parent=1 // pred_region
      %s50 = ssub.s32 1024, 1024
      %51 = vsyncadd [#allocation6], %s50
      %s52 = sshll.u32 [#allocation7], 4
      %s53 = int_to_ptr.vmem [resolvable:$true] %s52
      %58 = dma.hbm_to_vmem [thread:$0]  %s2, 1024, %s53, [#allocation6], 64, 64, 4
    $region13: #{vae_forward.1} parent=1 // pred_fallthru
      _
    // Predicated region
    $region14: #{vae_forward.1} parent=1 // pred_check
      _
    $region15: #{vae_forward.1} parent=1 // pred_check_branch
      %60 = sbr.rel (0) target = $region17
    $region16: #{vae_forward.1} parent=1 // pred_region
      _
    $region17: #{vae_forward.1} parent=1 // pred_fallthru
      _
    // Predicated region
    $region18: #{vae_forward.1} parent=1 // pred_check
      _
    $region19: #{vae_forward.1} parent=1 // pred_check_branch
      %62 = sbr.rel (0) target = $region21
    $region20: #{vae_forward.1} parent=1 // pred_region
      %s64 = ssub.s32 2048, 2048
      %65 = vsyncadd [#allocation9], %s64
      %s66 = sshll.u32 [#allocation8], 4
      %s67 = int_to_ptr.vmem [resolvable:$true] %s66
      %72 = dma.hbm_to_vmem [thread:$0]  %s4, 2048, %s67, [#allocation9], 128, 128, 8
    $region21: #{vae_forward.1} parent=1 // pred_fallthru
      _
    // Predicated region
    $region22: #{vae_forward.1} parent=1 // pred_check
      _
    $region23: #{vae_forward.1} parent=1 // pred_check_branch
      %74 = sbr.rel (0) target = $region25
    $region24: #{vae_forward.1} parent=1 // pred_region
      _
    $region25: #{vae_forward.1} parent=1 // pred_fallthru
      _
    // Predicated region
    $region26: #{vae_forward.1} parent=1 // pred_check
      _
    $region27: #{vae_forward.1} parent=1 // pred_check_branch
      %76 = sbr.rel (0) target = $region29
    $region28: #{vae_forward.1} parent=1 // pred_region
      %s78 = ssub.s32 1024, 1024
      %79 = vsyncadd [#allocation9], %s78
      %s80 = sshll.u32 [#allocation10], 4
      %s81 = int_to_ptr.vmem [resolvable:$true] %s80
      %86 = dma.hbm_to_vmem [thread:$0]  %s6, 1024, %s81, [#allocation9], 64, 64, 4
    $region29: #{vae_forward.1} parent=1 // pred_fallthru
      _
    // Predicated region
    $region30: #{vae_forward.1} parent=1 // pred_check
      _
    $region31: #{vae_forward.1} parent=1 // pred_check_branch
      %88 = sbr.rel (0) target = $region33
    $region32: #{vae_forward.1} parent=1 // pred_region
      _
    $region33: #{vae_forward.1} parent=1 // pred_fallthru
      _
    // Predicated region
    $region34: #{vae_forward.1} parent=1 // pred_check
      _
    $region35: #{vae_forward.1} parent=1 // pred_check_branch
      %90 = sbr.rel (0) target = $region37
    $region36: #{vae_forward.1} parent=1 // pred_region
      %s92 = ssub.s32 1024, 1024
      %93 = vsyncadd [#allocation12], %s92
      %s94 = sshll.u32 [#allocation11], 4
      %s95 = int_to_ptr.vmem [resolvable:$true] %s94
      %100 = dma.hbm_to_vmem [thread:$0]  %s8, 1024, %s95, [#allocation12], 64, 64, 4
    $region37: #{vae_forward.1} parent=1 // pred_fallthru
      _
    // Predicated region
    $region38: #{vae_forward.1} parent=1 // pred_check
      _
    $region39: #{vae_forward.1} parent=1 // pred_check_branch
      %102 = sbr.rel (0) target = $region41
    $region40: #{vae_forward.1} parent=1 // pred_region
      _
    $region41: #{vae_forward.1} parent=1 // pred_fallthru
      _
    // Predicated region
    $region42: #{vae_forward.1} parent=1 // pred_check
      _
    $region43: #{vae_forward.1} parent=1 // pred_check_branch
      %104 = sbr.rel (0) target = $region45
    $region44: #{vae_forward.1} parent=1 // pred_region
      %105 = dma.done [#allocation3], 1024
    $region45: #{vae_forward.1} parent=1 // pred_fallthru
      _
    // Predicated region
    $region46: #{vae_forward.1} parent=1 // pred_check
      _
    $region47: #{vae_forward.1} parent=1 // pred_check_branch
      %107 = sbr.rel (0) target = $region49
    $region48: #{vae_forward.1} parent=1 // pred_region
      %108 = dma.done [#allocation6], 1024
    $region49: #{vae_forward.1} parent=1 // pred_fallthru
      _
    // Predicated region
    $region50: #{vae_forward.1} parent=1 // pred_check
      _
    $region51: #{vae_forward.1} parent=1 // pred_check_branch
      %110 = sbr.rel (0) target = $region53
    $region52: #{vae_forward.1} parent=1 // pred_region
      %111 = dma.done [#allocation6], 1024
    $region53: #{vae_forward.1} parent=1 // pred_fallthru
      _
    // Predicated region
    $region54: #{vae_forward.1} parent=1 // pred_check
      _
    $region55: #{vae_forward.1} parent=1 // pred_check_branch
      %113 = sbr.rel (0) target = $region57
    $region56: #{vae_forward.1} parent=1 // pred_region
      %114 = dma.done [#allocation9], 2048
    $region57: #{vae_forward.1} parent=1 // pred_fallthru
      _
    // Predicated region
    $region58: #{vae_forward.1} parent=1 // pred_check
      _
    $region59: #{vae_forward.1} parent=1 // pred_check_branch
      %116 = sbr.rel (0) target = $region61
    $region60: #{vae_forward.1} parent=1 // pred_region
      %117 = dma.done [#allocation9], 1024
    $region61: #{vae_forward.1} parent=1 // pred_fallthru
      _
    // Predicated region
    $region62: #{vae_forward.1} parent=1 // pred_check
      _
    $region63: #{vae_forward.1} parent=1 // pred_check_branch
      %119 = sbr.rel (0) target = $region65
    $region64: #{vae_forward.1} parent=1 // pred_region
      %120 = dma.done [#allocation12], 1024
    $region65: #{vae_forward.1} parent=1 // pred_fallthru
      _
    %v122 = vld [vmem:[#allocation2] sm:$0xf]
    %v123 = vld [vmem:[#allocation2 + $0x4] sm:$0xf]
    %v124 = vld [vmem:[#allocation2 + $0x8] sm:$0xf]
    %v125 = vld [vmem:[#allocation2 + $0xc] sm:$0xf]
    %v126 = vld [vmem:[#allocation2 + $0x10] sm:$0xf]
    %v127 = vld [vmem:[#allocation2 + $0x14] sm:$0xf]
    %v128 = vld [vmem:[#allocation2 + $0x18] sm:$0xf]
    %v129 = vld [vmem:[#allocation2 + $0x1c] sm:$0xf]
    %v130 = vld [vmem:[#allocation2 + $0x20] sm:$0xf]
    %v131 = vld [vmem:[#allocation2 + $0x24] sm:$0xf]
    %v132 = vld [vmem:[#allocation2 + $0x28] sm:$0xf]
    %v133 = vld [vmem:[#allocation2 + $0x2c] sm:$0xf]
    %v134 = vld [vmem:[#allocation2 + $0x30] sm:$0xf]
    %v135 = vld [vmem:[#allocation2 + $0x34] sm:$0xf]
    %v136 = vld [vmem:[#allocation2 + $0x38] sm:$0xf]
    %v137 = vld [vmem:[#allocation2 + $0x3c] sm:$0xf]
    %v138 = vld [vmem:[#allocation7] sm:$0xf]
    %v139 = vld [vmem:[#allocation7 + $0x4] sm:$0xf]
    %v140 = vld [vmem:[#allocation7 + $0x8] sm:$0xf]
    %v141 = vld [vmem:[#allocation7 + $0xc] sm:$0xf]
    %v142 = vld [vmem:[#allocation7 + $0x10] sm:$0xf]
    %v143 = vld [vmem:[#allocation7 + $0x14] sm:$0xf]
    %v144 = vld [vmem:[#allocation7 + $0x18] sm:$0xf]
    %v145 = vld [vmem:[#allocation7 + $0x1c] sm:$0xf]
    %v146 = vld [vmem:[#allocation7 + $0x20] sm:$0xf]
    %v147 = vld [vmem:[#allocation7 + $0x24] sm:$0xf]
    %v148 = vld [vmem:[#allocation7 + $0x28] sm:$0xf]
    %v149 = vld [vmem:[#allocation7 + $0x2c] sm:$0xf]
    %v150 = vld [vmem:[#allocation7 + $0x30] sm:$0xf]
    %v151 = vld [vmem:[#allocation7 + $0x34] sm:$0xf]
    %v152 = vld [vmem:[#allocation7 + $0x38] sm:$0xf]
    %v153 = vld [vmem:[#allocation7 + $0x3c] sm:$0xf]
    %v154 = vld [vmem:[%s3] sm:$0x1]
    %v156 = vlaneseq
    %v157 = vshrl.u32 %v156, 7
    %v158 = vsub.s32 0, %v157
    %v159 = vrot.slane %v154, %v158
    %v177 = vunpack.c.l.b16 %v122
    %v178 = vunpack.c.l.b16 %v123
    %v179 = vunpack.c.l.b16 %v124
    %v180 = vunpack.c.l.b16 %v125
    %v181 = vunpack.c.l.b16 %v126
    %v182 = vunpack.c.l.b16 %v127
    %v183 = vunpack.c.l.b16 %v128
    %v184 = vunpack.c.l.b16 %v129
    %v185 = vunpack.c.l.b16 %v130
    %v186 = vunpack.c.l.b16 %v131
    %v187 = vunpack.c.l.b16 %v132
    %v188 = vunpack.c.l.b16 %v133
    %v189 = vunpack.c.l.b16 %v134
    %v190 = vunpack.c.l.b16 %v135
    %v191 = vunpack.c.l.b16 %v136
    %v192 = vunpack.c.l.b16 %v137
    %v193 = vpack.c.b16 %v178, %v177
    %v194 = vpack.c.b16 %v180, %v179
    %v195 = vpack.c.b16 %v182, %v181
    %v196 = vpack.c.b16 %v184, %v183
    %v197 = vpack.c.b16 %v186, %v185
    %v198 = vpack.c.b16 %v188, %v187
    %v199 = vpack.c.b16 %v190, %v189
    %v200 = vpack.c.b16 %v192, %v191
    %v225 = vunpack.c.l.b16 %v138
    %v226 = vunpack.c.l.b16 %v139
    %v227 = vunpack.c.l.b16 %v140
    %v228 = vunpack.c.l.b16 %v141
    %v229 = vunpack.c.l.b16 %v142
    %v230 = vunpack.c.l.b16 %v143
    %v231 = vunpack.c.l.b16 %v144
    %v232 = vunpack.c.l.b16 %v145
    %v233 = vunpack.c.l.b16 %v146
    %v234 = vunpack.c.l.b16 %v147
    %v235 = vunpack.c.l.b16 %v148
    %v236 = vunpack.c.l.b16 %v149
    %v237 = vunpack.c.l.b16 %v150
    %v238 = vunpack.c.l.b16 %v151
    %v239 = vunpack.c.l.b16 %v152
    %v240 = vunpack.c.l.b16 %v153
    %v241 = vpack.c.b16 %v226, %v225
    %v242 = vpack.c.b16 %v228, %v227
    %v243 = vpack.c.b16 %v230, %v229
    %v244 = vpack.c.b16 %v232, %v231
    %v245 = vpack.c.b16 %v234, %v233
    %v246 = vpack.c.b16 %v236, %v235
    %v247 = vpack.c.b16 %v238, %v237
    %v248 = vpack.c.b16 %v240, %v239
    %257 = vmatprep.subr.bf16.mxu0 0
    %258 = vmatpush1.bf16.msra.mxu0 %v241
    %259 = vmatprep.subr.bf16.mxu0 0
    %260 = vmatpush1.bf16.msra.mxu0 %v242
    %261 = vmatprep.subr.bf16.mxu0 0
    %262 = vmatpush1.bf16.msra.mxu0 %v243
    %263 = vmatprep.subr.bf16.mxu0 0
    %264 = vmatpush1.bf16.msra.mxu0 %v244
    %265 = vmatprep.subr.bf16.mxu0 0
    %266 = vmatpush1.bf16.msra.mxu0 %v245
    %267 = vmatprep.subr.bf16.mxu0 0
    %268 = vmatpush1.bf16.msra.mxu0 %v246
    %269 = vmatprep.subr.bf16.mxu0 0
    %270 = vmatpush1.bf16.msra.mxu0 %v247
    %271 = vmatprep.subr.bf16.mxu0 0
    %272 = vmatpush1.bf16.msra.mxu0 %v248
    %273 = vmatprep.subr.bf16.mxu0 0
    %274 = vmatpush1.bf16.msra.mxu0 0
    %275 = vmatprep.subr.bf16.mxu0 0
    %276 = vmatpush1.bf16.msra.mxu0 0
    %277 = vmatprep.subr.bf16.mxu0 0
    %278 = vmatpush1.bf16.msra.mxu0 0
    %279 = vmatprep.subr.bf16.mxu0 0
    %280 = vmatpush1.bf16.msra.mxu0 0
    %281 = vmatprep.subr.bf16.mxu0 0
    %282 = vmatpush1.bf16.msra.mxu0 0
    %283 = vmatprep.subr.bf16.mxu0 0
    %284 = vmatpush1.bf16.msra.mxu0 0
    %285 = vmatprep.subr.bf16.mxu0 0
    %286 = vmatpush1.bf16.msra.mxu0 0
    %287 = vmatprep.subr.bf16.mxu0 0
    %288 = vmatpush1.bf16.msra.mxu0 0
    %289 = vmatprep.mubr.bf16.mxu0 0
    %290 = vmatmul.mubr.bf16.gmra.mrb[0].mxu0 %v193
    %v291 = vpop.f32.mrb[0].mxu0
    %v292 = vadd.f32 %v159, %v291
    %v293 = vpop.f32.mrb[0].mxu0
    %v294 = vpop.f32.mrb[0].mxu0
    %v295 = vadd.f32 %v159, %v294
    %v296 = vpop.f32.mrb[0].mxu0
    %297 = vmatprep.mubr.bf16.mxu0 0
    %298 = vmatmul.mubr.bf16.gmra.mrb[0].mxu0 %v194
    %v299 = vpop.f32.mrb[0].mxu0
    %v300 = vadd.f32 %v159, %v299
    %v301 = vpop.f32.mrb[0].mxu0
    %v302 = vpop.f32.mrb[0].mxu0
    %v303 = vadd.f32 %v159, %v302
    %v304 = vpop.f32.mrb[0].mxu0
    %305 = vmatprep.mubr.bf16.mxu0 0
    %306 = vmatmul.mubr.bf16.gmra.mrb[0].mxu0 %v195
    %v307 = vpop.f32.mrb[0].mxu0
    %v308 = vadd.f32 %v159, %v307
    %v309 = vpop.f32.mrb[0].mxu0
    %v310 = vpop.f32.mrb[0].mxu0
    %v311 = vadd.f32 %v159, %v310
    %v312 = vpop.f32.mrb[0].mxu0
    %313 = vmatprep.mubr.bf16.mxu0 0
    %314 = vmatmul.mubr.bf16.gmra.mrb[0].mxu0 %v196
    %v315 = vpop.f32.mrb[0].mxu0
    %v316 = vadd.f32 %v159, %v315
    %v317 = vpop.f32.mrb[0].mxu0
    %v318 = vpop.f32.mrb[0].mxu0
    %v319 = vadd.f32 %v159, %v318
    %v320 = vpop.f32.mrb[0].mxu0
    %321 = vmatprep.mubr.bf16.mxu0 0
    %322 = vmatmul.mubr.bf16.gmra.mrb[0].mxu0 %v197
    %v323 = vpop.f32.mrb[0].mxu0
    %v324 = vadd.f32 %v159, %v323
    %v325 = vpop.f32.mrb[0].mxu0
    %v326 = vpop.f32.mrb[0].mxu0
    %v327 = vadd.f32 %v159, %v326
    %v328 = vpop.f32.mrb[0].mxu0
    %329 = vmatprep.mubr.bf16.mxu0 0
    %330 = vmatmul.mubr.bf16.gmra.mrb[0].mxu0 %v198
    %v331 = vpop.f32.mrb[0].mxu0
    %v332 = vadd.f32 %v159, %v331
    %v333 = vpop.f32.mrb[0].mxu0
    %v334 = vpop.f32.mrb[0].mxu0
    %v335 = vadd.f32 %v159, %v334
    %v336 = vpop.f32.mrb[0].mxu0
    %337 = vmatprep.mubr.bf16.mxu0 0
    %338 = vmatmul.mubr.bf16.gmra.mrb[0].mxu0 %v199
    %v339 = vpop.f32.mrb[0].mxu0
    %v340 = vadd.f32 %v159, %v339
    %v341 = vpop.f32.mrb[0].mxu0
    %v342 = vpop.f32.mrb[0].mxu0
    %v343 = vadd.f32 %v159, %v342
    %v344 = vpop.f32.mrb[0].mxu0
    %345 = vmatprep.mubr.bf16.mxu0 0
    %346 = vmatmul.mubr.bf16.gmra.mrb[0].mxu0 %v200
    %v347 = vpop.f32.mrb[0].mxu0
    %v348 = vadd.f32 %v159, %v347
    %v349 = vpop.f32.mrb[0].mxu0
    %v350 = vpop.f32.mrb[0].mxu0
    %v351 = vadd.f32 %v159, %v350
    %v352 = vpop.f32.mrb[0].mxu0
    %353 = vdwg.mxu0
    %v354 = vmax.f32 %v292, 0.0
    %v355 = vmax.f32 %v295, 0.0
    %v356 = vmax.f32 %v300, 0.0
    %v357 = vmax.f32 %v303, 0.0
    %v358 = vmax.f32 %v308, 0.0
    %v359 = vmax.f32 %v311, 0.0
    %v360 = vmax.f32 %v316, 0.0
    %v361 = vmax.f32 %v319, 0.0
    %v362 = vmax.f32 %v324, 0.0
    %v363 = vmax.f32 %v327, 0.0
    %v364 = vmax.f32 %v332, 0.0
    %v365 = vmax.f32 %v335, 0.0
    %v366 = vmax.f32 %v340, 0.0
    %v367 = vmax.f32 %v343, 0.0
    %v368 = vmax.f32 %v348, 0.0
    %v369 = vmax.f32 %v351, 0.0
    %v370 = vpack.c.bf16 %v355, %v354
    %v371 = vpack.c.bf16 %v357, %v356
    %v372 = vpack.c.bf16 %v359, %v358
    %v373 = vpack.c.bf16 %v361, %v360
    %v374 = vpack.c.bf16 %v363, %v362
    %v375 = vpack.c.bf16 %v365, %v364
    %v376 = vpack.c.bf16 %v367, %v366
    %v377 = vpack.c.bf16 %v369, %v368
    %v378 = vld [vmem:[#allocation8] sm:$0xff]
    %v379 = vld [vmem:[#allocation8 + $0x8] sm:$0xff]
    %v380 = vld [vmem:[#allocation8 + $0x10] sm:$0xff]
    %v381 = vld [vmem:[#allocation8 + $0x18] sm:$0xff]
    %v382 = vld [vmem:[#allocation8 + $0x20] sm:$0xff]
    %v383 = vld [vmem:[#allocation8 + $0x28] sm:$0xff]
    %v384 = vld [vmem:[#allocation8 + $0x30] sm:$0xff]
    %v385 = vld [vmem:[#allocation8 + $0x38] sm:$0xff]
    %v386 = vld [vmem:[#allocation8 + $0x40] sm:$0xff]
    %v387 = vld [vmem:[#allocation8 + $0x48] sm:$0xff]
    %v388 = vld [vmem:[#allocation8 + $0x50] sm:$0xff]
    %v389 = vld [vmem:[#allocation8 + $0x58] sm:$0xff]
    %v390 = vld [vmem:[#allocation8 + $0x60] sm:$0xff]
    %v391 = vld [vmem:[#allocation8 + $0x68] sm:$0xff]
    %v392 = vld [vmem:[#allocation8 + $0x70] sm:$0xff]
    %v393 = vld [vmem:[#allocation8 + $0x78] sm:$0xff]
    %v394 = vld [vmem:[%s5] sm:$0x3]
    %v396 = vlaneseq
    %v397 = vshrl.u32 %v396, 7
    %v398 = vsub.s32 0, %v397
    %v399 = vrot.slane %v394, %v398
    %v400 = vlaneseq
    %v401 = vshrl.u32 %v400, 7
    %v402 = vsub.s32 1, %v401
    %v403 = vrot.slane %v394, %v402
    %v422 = vunpack.c.l.b16 %v378
    %v423 = vunpack.c.h.b16 %v378
    %v424 = vunpack.c.l.b16 %v379
    %v425 = vunpack.c.h.b16 %v379
    %v426 = vunpack.c.l.b16 %v380
    %v427 = vunpack.c.h.b16 %v380
    %v428 = vunpack.c.l.b16 %v381
    %v429 = vunpack.c.h.b16 %v381
    %v430 = vunpack.c.l.b16 %v382
    %v431 = vunpack.c.h.b16 %v382
    %v432 = vunpack.c.l.b16 %v383
    %v433 = vunpack.c.h.b16 %v383
    %v434 = vunpack.c.l.b16 %v384
    %v435 = vunpack.c.h.b16 %v384
    %v436 = vunpack.c.l.b16 %v385
    %v437 = vunpack.c.h.b16 %v385
    %v438 = vunpack.c.l.b16 %v386
    %v439 = vunpack.c.h.b16 %v386
    %v440 = vunpack.c.l.b16 %v387
    %v441 = vunpack.c.h.b16 %v387
    %v442 = vunpack.c.l.b16 %v388
    %v443 = vunpack.c.h.b16 %v388
    %v444 = vunpack.c.l.b16 %v389
    %v445 = vunpack.c.h.b16 %v389
    %v446 = vunpack.c.l.b16 %v390
    %v447 = vunpack.c.h.b16 %v390
    %v448 = vunpack.c.l.b16 %v391
    %v449 = vunpack.c.h.b16 %v391
    %v450 = vunpack.c.l.b16 %v392
    %v451 = vunpack.c.h.b16 %v392
    %v452 = vunpack.c.l.b16 %v393
    %v453 = vunpack.c.h.b16 %v393
    %v454 = vpack.c.b16 %v424, %v422
    %v455 = vpack.c.b16 %v425, %v423
    %v456 = vpack.c.b16 %v428, %v426
    %v457 = vpack.c.b16 %v429, %v427
    %v458 = vpack.c.b16 %v432, %v430
    %v459 = vpack.c.b16 %v433, %v431
    %v460 = vpack.c.b16 %v436, %v434
    %v461 = vpack.c.b16 %v437, %v435
    %v462 = vpack.c.b16 %v440, %v438
    %v463 = vpack.c.b16 %v441, %v439
    %v464 = vpack.c.b16 %v444, %v442
    %v465 = vpack.c.b16 %v445, %v443
    %v466 = vpack.c.b16 %v448, %v446
    %v467 = vpack.c.b16 %v449, %v447
    %v468 = vpack.c.b16 %v452, %v450
    %v469 = vpack.c.b16 %v453, %v451
    %486 = vmatprep.subr.bf16.mxu0 %v455
    %487 = vmatpush1.bf16.msra.mxu0 %v454
    %488 = vmatprep.subr.bf16.mxu0 %v457
    %489 = vmatpush1.bf16.msra.mxu0 %v456
    %490 = vmatprep.subr.bf16.mxu0 %v459
    %491 = vmatpush1.bf16.msra.mxu0 %v458
    %492 = vmatprep.subr.bf16.mxu0 %v461
    %493 = vmatpush1.bf16.msra.mxu0 %v460
    %494 = vmatprep.subr.bf16.mxu0 %v463
    %495 = vmatpush1.bf16.msra.mxu0 %v462
    %496 = vmatprep.subr.bf16.mxu0 %v465
    %497 = vmatpush1.bf16.msra.mxu0 %v464
    %498 = vmatprep.subr.bf16.mxu0 %v467
    %499 = vmatpush1.bf16.msra.mxu0 %v466
    %500 = vmatprep.subr.bf16.mxu0 %v469
    %501 = vmatpush1.bf16.msra.mxu0 %v468
    %502 = vmatprep.subr.bf16.mxu0 0
    %503 = vmatpush1.bf16.msra.mxu0 0
    %504 = vmatprep.subr.bf16.mxu0 0
    %505 = vmatpush1.bf16.msra.mxu0 0
    %506 = vmatprep.subr.bf16.mxu0 0
    %507 = vmatpush1.bf16.msra.mxu0 0
    %508 = vmatprep.subr.bf16.mxu0 0
    %509 = vmatpush1.bf16.msra.mxu0 0
    %510 = vmatprep.subr.bf16.mxu0 0
    %511 = vmatpush1.bf16.msra.mxu0 0
    %512 = vmatprep.subr.bf16.mxu0 0
    %513 = vmatpush1.bf16.msra.mxu0 0
    %514 = vmatprep.subr.bf16.mxu0 0
    %515 = vmatpush1.bf16.msra.mxu0 0
    %516 = vmatprep.subr.bf16.mxu0 0
    %517 = vmatpush1.bf16.msra.mxu0 0
    %518 = vmatprep.mubr.bf16.mxu0 0
    %519 = vmatmul.mubr.bf16.gmra.mrb[0].mxu0 %v370
    %v520 = vpop.f32.mrb[0].mxu0
    %v521 = vadd.f32 %v399, %v520
    %v522 = vpop.f32.mrb[0].mxu0
    %v523 = vadd.f32 %v403, %v522
    %v524 = vpop.f32.mrb[0].mxu0
    %v525 = vadd.f32 %v399, %v524
    %v526 = vpop.f32.mrb[0].mxu0
    %v527 = vadd.f32 %v403, %v526
    %528 = vmatprep.mubr.bf16.mxu0 0
    %529 = vmatmul.mubr.bf16.gmra.mrb[0].mxu0 %v371
    %v530 = vpop.f32.mrb[0].mxu0
    %v531 = vadd.f32 %v399, %v530
    %v532 = vpop.f32.mrb[0].mxu0
    %v533 = vadd.f32 %v403, %v532
    %v534 = vpop.f32.mrb[0].mxu0
    %v535 = vadd.f32 %v399, %v534
    %v536 = vpop.f32.mrb[0].mxu0
    %v537 = vadd.f32 %v403, %v536
    %538 = vmatprep.mubr.bf16.mxu0 0
    %539 = vmatmul.mubr.bf16.gmra.mrb[0].mxu0 %v372
    %v540 = vpop.f32.mrb[0].mxu0
    %v541 = vadd.f32 %v399, %v540
    %v542 = vpop.f32.mrb[0].mxu0
    %v543 = vadd.f32 %v403, %v542
    %v544 = vpop.f32.mrb[0].mxu0
    %v545 = vadd.f32 %v399, %v544
    %v546 = vpop.f32.mrb[0].mxu0
    %v547 = vadd.f32 %v403, %v546
    %548 = vmatprep.mubr.bf16.mxu0 0
    %549 = vmatmul.mubr.bf16.gmra.mrb[0].mxu0 %v373
    %v550 = vpop.f32.mrb[0].mxu0
    %v551 = vadd.f32 %v399, %v550
    %v552 = vpop.f32.mrb[0].mxu0
    %v553 = vadd.f32 %v403, %v552
    %v554 = vpop.f32.mrb[0].mxu0
    %v555 = vadd.f32 %v399, %v554
    %v556 = vpop.f32.mrb[0].mxu0
    %v557 = vadd.f32 %v403, %v556
    %558 = vmatprep.mubr.bf16.mxu0 0
    %559 = vmatmul.mubr.bf16.gmra.mrb[0].mxu0 %v374
    %v560 = vpop.f32.mrb[0].mxu0
    %v561 = vadd.f32 %v399, %v560
    %v562 = vpop.f32.mrb[0].mxu0
    %v563 = vadd.f32 %v403, %v562
    %v564 = vpop.f32.mrb[0].mxu0
    %v565 = vadd.f32 %v399, %v564
    %v566 = vpop.f32.mrb[0].mxu0
    %v567 = vadd.f32 %v403, %v566
    %568 = vmatprep.mubr.bf16.mxu0 0
    %569 = vmatmul.mubr.bf16.gmra.mrb[0].mxu0 %v375
    %v570 = vpop.f32.mrb[0].mxu0
    %v571 = vadd.f32 %v399, %v570
    %v572 = vpop.f32.mrb[0].mxu0
    %v573 = vadd.f32 %v403, %v572
    %v574 = vpop.f32.mrb[0].mxu0
    %v575 = vadd.f32 %v399, %v574
    %v576 = vpop.f32.mrb[0].mxu0
    %v577 = vadd.f32 %v403, %v576
    %578 = vmatprep.mubr.bf16.mxu0 0
    %579 = vmatmul.mubr.bf16.gmra.mrb[0].mxu0 %v376
    %v580 = vpop.f32.mrb[0].mxu0
    %v581 = vadd.f32 %v399, %v580
    %v582 = vpop.f32.mrb[0].mxu0
    %v583 = vadd.f32 %v403, %v582
    %v584 = vpop.f32.mrb[0].mxu0
    %v585 = vadd.f32 %v399, %v584
    %v586 = vpop.f32.mrb[0].mxu0
    %v587 = vadd.f32 %v403, %v586
    %588 = vmatprep.mubr.bf16.mxu0 0
    %589 = vmatmul.mubr.bf16.gmra.mrb[0].mxu0 %v377
    %v590 = vpop.f32.mrb[0].mxu0
    %v591 = vadd.f32 %v399, %v590
    %v592 = vpop.f32.mrb[0].mxu0
    %v593 = vadd.f32 %v403, %v592
    %v594 = vpop.f32.mrb[0].mxu0
    %v595 = vadd.f32 %v399, %v594
    %v596 = vpop.f32.mrb[0].mxu0
    %v597 = vadd.f32 %v403, %v596
    %598 = vdwg.mxu0
    %599 = vst [vmem:[#allocation14] sm:$0xff] %v521
    %600 = vst [vmem:[#allocation14 + $0x8] sm:$0xff] %v523
    %601 = vst [vmem:[#allocation14 + $0x10] sm:$0xff] %v525
    %602 = vst [vmem:[#allocation14 + $0x18] sm:$0xff] %v527
    %603 = vst [vmem:[#allocation14 + $0x20] sm:$0xff] %v531
    %604 = vst [vmem:[#allocation14 + $0x28] sm:$0xff] %v533
    %605 = vst [vmem:[#allocation14 + $0x30] sm:$0xff] %v535
    %606 = vst [vmem:[#allocation14 + $0x38] sm:$0xff] %v537
    %607 = vst [vmem:[#allocation14 + $0x40] sm:$0xff] %v541
    %608 = vst [vmem:[#allocation14 + $0x48] sm:$0xff] %v543
    %609 = vst [vmem:[#allocation14 + $0x50] sm:$0xff] %v545
    %610 = vst [vmem:[#allocation14 + $0x58] sm:$0xff] %v547
    %611 = vst [vmem:[#allocation14 + $0x60] sm:$0xff] %v551
    %612 = vst [vmem:[#allocation14 + $0x68] sm:$0xff] %v553
    %613 = vst [vmem:[#allocation14 + $0x70] sm:$0xff] %v555
    %614 = vst [vmem:[#allocation14 + $0x78] sm:$0xff] %v557
    %615 = vst [vmem:[#allocation14 + $0x80] sm:$0xff] %v561
    %616 = vst [vmem:[#allocation14 + $0x88] sm:$0xff] %v563
    %617 = vst [vmem:[#allocation14 + $0x90] sm:$0xff] %v565
    %618 = vst [vmem:[#allocation14 + $0x98] sm:$0xff] %v567
    %619 = vst [vmem:[#allocation14 + $0xa0] sm:$0xff] %v571
    %620 = vst [vmem:[#allocation14 + $0xa8] sm:$0xff] %v573
    %621 = vst [vmem:[#allocation14 + $0xb0] sm:$0xff] %v575
    %622 = vst [vmem:[#allocation14 + $0xb8] sm:$0xff] %v577
    %623 = vst [vmem:[#allocation14 + $0xc0] sm:$0xff] %v581
    %624 = vst [vmem:[#allocation14 + $0xc8] sm:$0xff] %v583
    %625 = vst [vmem:[#allocation14 + $0xd0] sm:$0xff] %v585
    %626 = vst [vmem:[#allocation14 + $0xd8] sm:$0xff] %v587
    %627 = vst [vmem:[#allocation14 + $0xe0] sm:$0xff] %v591
    %628 = vst [vmem:[#allocation14 + $0xe8] sm:$0xff] %v593
    %629 = vst [vmem:[#allocation14 + $0xf0] sm:$0xff] %v595
    %630 = vst [vmem:[#allocation14 + $0xf8] sm:$0xff] %v597
    %v631 = vld [vmem:[#allocation5] sm:$0xf]
    %v632 = vld [vmem:[#allocation5 + $0x4] sm:$0xf]
    %v633 = vld [vmem:[#allocation5 + $0x8] sm:$0xf]
    %v634 = vld [vmem:[#allocation5 + $0xc] sm:$0xf]
    %v635 = vld [vmem:[#allocation5 + $0x10] sm:$0xf]
    %v636 = vld [vmem:[#allocation5 + $0x14] sm:$0xf]
    %v637 = vld [vmem:[#allocation5 + $0x18] sm:$0xf]
    %v638 = vld [vmem:[#allocation5 + $0x1c] sm:$0xf]
    %v639 = vld [vmem:[#allocation5 + $0x20] sm:$0xf]
    %v640 = vld [vmem:[#allocation5 + $0x24] sm:$0xf]
    %v641 = vld [vmem:[#allocation5 + $0x28] sm:$0xf]
    %v642 = vld [vmem:[#allocation5 + $0x2c] sm:$0xf]
    %v643 = vld [vmem:[#allocation5 + $0x30] sm:$0xf]
    %v644 = vld [vmem:[#allocation5 + $0x34] sm:$0xf]
    %v645 = vld [vmem:[#allocation5 + $0x38] sm:$0xf]
    %v646 = vld [vmem:[#allocation5 + $0x3c] sm:$0xf]
    %v647 = vunpack.c.l.bf16 %v631
    %v648 = vunpack.c.l.bf16 %v632
    %v649 = vunpack.c.l.bf16 %v633
    %v650 = vunpack.c.l.bf16 %v634
    %v651 = vunpack.c.l.bf16 %v635
    %v652 = vunpack.c.l.bf16 %v636
    %v653 = vunpack.c.l.bf16 %v637
    %v654 = vunpack.c.l.bf16 %v638
    %v655 = vunpack.c.l.bf16 %v639
    %v656 = vunpack.c.l.bf16 %v640
    %v657 = vunpack.c.l.bf16 %v641
    %v658 = vunpack.c.l.bf16 %v642
    %v659 = vunpack.c.l.bf16 %v643
    %v660 = vunpack.c.l.bf16 %v644
    %v661 = vunpack.c.l.bf16 %v645
    %v662 = vunpack.c.l.bf16 %v646
    %v663 = vmul.f32 %v523, 0.5
    %v664 = vmul.f32 %v527, 0.5
    %v665 = vmul.f32 %v533, 0.5
    %v666 = vmul.f32 %v537, 0.5
    %v667 = vmul.f32 %v543, 0.5
    %v668 = vmul.f32 %v547, 0.5
    %v669 = vmul.f32 %v553, 0.5
    %v670 = vmul.f32 %v557, 0.5
    %v671 = vmul.f32 %v563, 0.5
    %v672 = vmul.f32 %v567, 0.5
    %v673 = vmul.f32 %v573, 0.5
    %v674 = vmul.f32 %v577, 0.5
    %v675 = vmul.f32 %v583, 0.5
    %v676 = vmul.f32 %v587, 0.5
    %v677 = vmul.f32 %v593, 0.5
    %v678 = vmul.f32 %v597, 0.5
    %v679 = vmul.f32 %v663, 1.442695
    %v680 = vpow.pop %v679
    %v681 = vmul.f32 %v664, 1.442695
    %v682 = vpow.pop %v681
    %v683 = vmul.f32 %v665, 1.442695
    %v684 = vpow.pop %v683
    %v685 = vmul.f32 %v666, 1.442695
    %v686 = vpow.pop %v685
    %v687 = vmul.f32 %v667, 1.442695
    %v688 = vpow.pop %v687
    %v689 = vmul.f32 %v668, 1.442695
    %v690 = vpow.pop %v689
    %v691 = vmul.f32 %v669, 1.442695
    %v692 = vpow.pop %v691
    %v693 = vmul.f32 %v670, 1.442695
    %v694 = vpow.pop %v693
    %v695 = vmul.f32 %v671, 1.442695
    %v696 = vpow.pop %v695
    %v697 = vmul.f32 %v672, 1.442695
    %v698 = vpow.pop %v697
    %v699 = vmul.f32 %v673, 1.442695
    %v700 = vpow.pop %v699
    %v701 = vmul.f32 %v674, 1.442695
    %v702 = vpow.pop %v701
    %v703 = vmul.f32 %v675, 1.442695
    %v704 = vpow.pop %v703
    %v705 = vmul.f32 %v676, 1.442695
    %v706 = vpow.pop %v705
    %v707 = vmul.f32 %v677, 1.442695
    %v708 = vpow.pop %v707
    %v709 = vmul.f32 %v678, 1.442695
    %v710 = vpow.pop %v709
    %v711 = vmul.f32 %v647, %v680
    %v712 = vmul.f32 %v648, %v682
    %v713 = vmul.f32 %v649, %v684
    %v714 = vmul.f32 %v650, %v686
    %v715 = vmul.f32 %v651, %v688
    %v716 = vmul.f32 %v652, %v690
    %v717 = vmul.f32 %v653, %v692
    %v718 = vmul.f32 %v654, %v694
    %v719 = vmul.f32 %v655, %v696
    %v720 = vmul.f32 %v656, %v698
    %v721 = vmul.f32 %v657, %v700
    %v722 = vmul.f32 %v658, %v702
    %v723 = vmul.f32 %v659, %v704
    %v724 = vmul.f32 %v660, %v706
    %v725 = vmul.f32 %v661, %v708
    %v726 = vmul.f32 %v662, %v710
    %v727 = vadd.f32 %v521, %v711
    %v728 = vadd.f32 %v525, %v712
    %v729 = vadd.f32 %v531, %v713
    %v730 = vadd.f32 %v535, %v714
    %v731 = vadd.f32 %v541, %v715
    %v732 = vadd.f32 %v545, %v716
    %v733 = vadd.f32 %v551, %v717
    %v734 = vadd.f32 %v555, %v718
    %v735 = vadd.f32 %v561, %v719
    %v736 = vadd.f32 %v565, %v720
    %v737 = vadd.f32 %v571, %v721
    %v738 = vadd.f32 %v575, %v722
    %v739 = vadd.f32 %v581, %v723
    %v740 = vadd.f32 %v585, %v724
    %v741 = vadd.f32 %v591, %v725
    %v742 = vadd.f32 %v595, %v726
    %v743 = vpack.c.bf16 %v728, %v727
    %v744 = vpack.c.bf16 %v730, %v729
    %v745 = vpack.c.bf16 %v732, %v731
    %v746 = vpack.c.bf16 %v734, %v733
    %v747 = vpack.c.bf16 %v736, %v735
    %v748 = vpack.c.bf16 %v738, %v737
    %v749 = vpack.c.bf16 %v740, %v739
    %v750 = vpack.c.bf16 %v742, %v741
    %v751 = vld [vmem:[#allocation10] sm:$0xf]
    %v752 = vld [vmem:[#allocation10 + $0x4] sm:$0xf]
    %v753 = vld [vmem:[#allocation10 + $0x8] sm:$0xf]
    %v754 = vld [vmem:[#allocation10 + $0xc] sm:$0xf]
    %v755 = vld [vmem:[#allocation10 + $0x10] sm:$0xf]
    %v756 = vld [vmem:[#allocation10 + $0x14] sm:$0xf]
    %v757 = vld [vmem:[#allocation10 + $0x18] sm:$0xf]
    %v758 = vld [vmem:[#allocation10 + $0x1c] sm:$0xf]
    %v759 = vld [vmem:[#allocation10 + $0x20] sm:$0xf]
    %v760 = vld [vmem:[#allocation10 + $0x24] sm:$0xf]
    %v761 = vld [vmem:[#allocation10 + $0x28] sm:$0xf]
    %v762 = vld [vmem:[#allocation10 + $0x2c] sm:$0xf]
    %v763 = vld [vmem:[#allocation10 + $0x30] sm:$0xf]
    %v764 = vld [vmem:[#allocation10 + $0x34] sm:$0xf]
    %v765 = vld [vmem:[#allocation10 + $0x38] sm:$0xf]
    %v766 = vld [vmem:[#allocation10 + $0x3c] sm:$0xf]
    %v767 = vld [vmem:[%s7] sm:$0x1]
    %v769 = vlaneseq
    %v770 = vshrl.u32 %v769, 7
    %v771 = vsub.s32 0, %v770
    %v772 = vrot.slane %v767, %v771
    %v790 = vunpack.c.l.b16 %v751
    %v791 = vunpack.c.l.b16 %v752
    %v792 = vunpack.c.l.b16 %v753
    %v793 = vunpack.c.l.b16 %v754
    %v794 = vunpack.c.l.b16 %v755
    %v795 = vunpack.c.l.b16 %v756
    %v796 = vunpack.c.l.b16 %v757
    %v797 = vunpack.c.l.b16 %v758
    %v798 = vunpack.c.l.b16 %v759
    %v799 = vunpack.c.l.b16 %v760
    %v800 = vunpack.c.l.b16 %v761
    %v801 = vunpack.c.l.b16 %v762
    %v802 = vunpack.c.l.b16 %v763
    %v803 = vunpack.c.l.b16 %v764
    %v804 = vunpack.c.l.b16 %v765
    %v805 = vunpack.c.l.b16 %v766
    %v806 = vpack.c.b16 %v791, %v790
    %v807 = vpack.c.b16 %v793, %v792
    %v808 = vpack.c.b16 %v795, %v794
    %v809 = vpack.c.b16 %v797, %v796
    %v810 = vpack.c.b16 %v799, %v798
    %v811 = vpack.c.b16 %v801, %v800
    %v812 = vpack.c.b16 %v803, %v802
    %v813 = vpack.c.b16 %v805, %v804
    %822 = vmatprep.subr.bf16.mxu0 0
    %823 = vmatpush1.bf16.msra.mxu0 %v806
    %824 = vmatprep.subr.bf16.mxu0 0
    %825 = vmatpush1.bf16.msra.mxu0 %v807
    %826 = vmatprep.subr.bf16.mxu0 0
    %827 = vmatpush1.bf16.msra.mxu0 %v808
    %828 = vmatprep.subr.bf16.mxu0 0
    %829 = vmatpush1.bf16.msra.mxu0 %v809
    %830 = vmatprep.subr.bf16.mxu0 0
    %831 = vmatpush1.bf16.msra.mxu0 %v810
    %832 = vmatprep.subr.bf16.mxu0 0
    %833 = vmatpush1.bf16.msra.mxu0 %v811
    %834 = vmatprep.subr.bf16.mxu0 0
    %835 = vmatpush1.bf16.msra.mxu0 %v812
    %836 = vmatprep.subr.bf16.mxu0 0
    %837 = vmatpush1.bf16.msra.mxu0 %v813
    %838 = vmatprep.subr.bf16.mxu0 0
    %839 = vmatpush1.bf16.msra.mxu0 0
    %840 = vmatprep.subr.bf16.mxu0 0
    %841 = vmatpush1.bf16.msra.mxu0 0
    %842 = vmatprep.subr.bf16.mxu0 0
    %843 = vmatpush1.bf16.msra.mxu0 0
    %844 = vmatprep.subr.bf16.mxu0 0
    %845 = vmatpush1.bf16.msra.mxu0 0
    %846 = vmatprep.subr.bf16.mxu0 0
    %847 = vmatpush1.bf16.msra.mxu0 0
    %848 = vmatprep.subr.bf16.mxu0 0
    %849 = vmatpush1.bf16.msra.mxu0 0
    %850 = vmatprep.subr.bf16.mxu0 0
    %851 = vmatpush1.bf16.msra.mxu0 0
    %852 = vmatprep.subr.bf16.mxu0 0
    %853 = vmatpush1.bf16.msra.mxu0 0
    %854 = vmatprep.mubr.bf16.mxu0 0
    %855 = vmatmul.mubr.bf16.gmra.mrb[0].mxu0 %v743
    %v856 = vpop.f32.mrb[0].mxu0
    %v857 = vadd.f32 %v772, %v856
    %v858 = vpop.f32.mrb[0].mxu0
    %v859 = vpop.f32.mrb[0].mxu0
    %v860 = vadd.f32 %v772, %v859
    %v861 = vpop.f32.mrb[0].mxu0
    %862 = vmatprep.mubr.bf16.mxu0 0
    %863 = vmatmul.mubr.bf16.gmra.mrb[0].mxu0 %v744
    %v864 = vpop.f32.mrb[0].mxu0
    %v865 = vadd.f32 %v772, %v864
    %v866 = vpop.f32.mrb[0].mxu0
    %v867 = vpop.f32.mrb[0].mxu0
    %v868 = vadd.f32 %v772, %v867
    %v869 = vpop.f32.mrb[0].mxu0
    %870 = vmatprep.mubr.bf16.mxu0 0
    %871 = vmatmul.mubr.bf16.gmra.mrb[0].mxu0 %v745
    %v872 = vpop.f32.mrb[0].mxu0
    %v873 = vadd.f32 %v772, %v872
    %v874 = vpop.f32.mrb[0].mxu0
    %v875 = vpop.f32.mrb[0].mxu0
    %v876 = vadd.f32 %v772, %v875
    %v877 = vpop.f32.mrb[0].mxu0
    %878 = vmatprep.mubr.bf16.mxu0 0
    %879 = vmatmul.mubr.bf16.gmra.mrb[0].mxu0 %v746
    %v880 = vpop.f32.mrb[0].mxu0
    %v881 = vadd.f32 %v772, %v880
    %v882 = vpop.f32.mrb[0].mxu0
    %v883 = vpop.f32.mrb[0].mxu0
    %v884 = vadd.f32 %v772, %v883
    %v885 = vpop.f32.mrb[0].mxu0
    %886 = vmatprep.mubr.bf16.mxu0 0
    %887 = vmatmul.mubr.bf16.gmra.mrb[0].mxu0 %v747
    %v888 = vpop.f32.mrb[0].mxu0
    %v889 = vadd.f32 %v772, %v888
    %v890 = vpop.f32.mrb[0].mxu0
    %v891 = vpop.f32.mrb[0].mxu0
    %v892 = vadd.f32 %v772, %v891
    %v893 = vpop.f32.mrb[0].mxu0
    %894 = vmatprep.mubr.bf16.mxu0 0
    %895 = vmatmul.mubr.bf16.gmra.mrb[0].mxu0 %v748
    %v896 = vpop.f32.mrb[0].mxu0
    %v897 = vadd.f32 %v772, %v896
    %v898 = vpop.f32.mrb[0].mxu0
    %v899 = vpop.f32.mrb[0].mxu0
    %v900 = vadd.f32 %v772, %v899
    %v901 = vpop.f32.mrb[0].mxu0
    %902 = vmatprep.mubr.bf16.mxu0 0
    %903 = vmatmul.mubr.bf16.gmra.mrb[0].mxu0 %v749
    %v904 = vpop.f32.mrb[0].mxu0
    %v905 = vadd.f32 %v772, %v904
    %v906 = vpop.f32.mrb[0].mxu0
    %v907 = vpop.f32.mrb[0].mxu0
    %v908 = vadd.f32 %v772, %v907
    %v909 = vpop.f32.mrb[0].mxu0
    %910 = vmatprep.mubr.bf16.mxu0 0
    %911 = vmatmul.mubr.bf16.gmra.mrb[0].mxu0 %v750
    %v912 = vpop.f32.mrb[0].mxu0
    %v913 = vadd.f32 %v772, %v912
    %v914 = vpop.f32.mrb[0].mxu0
    %v915 = vpop.f32.mrb[0].mxu0
    %v916 = vadd.f32 %v772, %v915
    %v917 = vpop.f32.mrb[0].mxu0
    %918 = vdwg.mxu0
    %v919 = vmax.f32 %v857, 0.0
    %v920 = vmax.f32 %v860, 0.0
    %v921 = vmax.f32 %v865, 0.0
    %v922 = vmax.f32 %v868, 0.0
    %v923 = vmax.f32 %v873, 0.0
    %v924 = vmax.f32 %v876, 0.0
    %v925 = vmax.f32 %v881, 0.0
    %v926 = vmax.f32 %v884, 0.0
    %v927 = vmax.f32 %v889, 0.0
    %v928 = vmax.f32 %v892, 0.0
    %v929 = vmax.f32 %v897, 0.0
    %v930 = vmax.f32 %v900, 0.0
    %v931 = vmax.f32 %v905, 0.0
    %v932 = vmax.f32 %v908, 0.0
    %v933 = vmax.f32 %v913, 0.0
    %v934 = vmax.f32 %v916, 0.0
    %v935 = vpack.c.bf16 %v920, %v919
    %v936 = vpack.c.bf16 %v922, %v921
    %v937 = vpack.c.bf16 %v924, %v923
    %v938 = vpack.c.bf16 %v926, %v925
    %v939 = vpack.c.bf16 %v928, %v927
    %v940 = vpack.c.bf16 %v930, %v929
    %v941 = vpack.c.bf16 %v932, %v931
    %v942 = vpack.c.bf16 %v934, %v933
    %v943 = vld [vmem:[#allocation11] sm:$0xf]
    %v944 = vld [vmem:[#allocation11 + $0x4] sm:$0xf]
    %v945 = vld [vmem:[#allocation11 + $0x8] sm:$0xf]
    %v946 = vld [vmem:[#allocation11 + $0xc] sm:$0xf]
    %v947 = vld [vmem:[#allocation11 + $0x10] sm:$0xf]
    %v948 = vld [vmem:[#allocation11 + $0x14] sm:$0xf]
    %v949 = vld [vmem:[#allocation11 + $0x18] sm:$0xf]
    %v950 = vld [vmem:[#allocation11 + $0x1c] sm:$0xf]
    %v951 = vld [vmem:[#allocation11 + $0x20] sm:$0xf]
    %v952 = vld [vmem:[#allocation11 + $0x24] sm:$0xf]
    %v953 = vld [vmem:[#allocation11 + $0x28] sm:$0xf]
    %v954 = vld [vmem:[#allocation11 + $0x2c] sm:$0xf]
    %v955 = vld [vmem:[#allocation11 + $0x30] sm:$0xf]
    %v956 = vld [vmem:[#allocation11 + $0x34] sm:$0xf]
    %v957 = vld [vmem:[#allocation11 + $0x38] sm:$0xf]
    %v958 = vld [vmem:[#allocation11 + $0x3c] sm:$0xf]
    %v959 = vld [vmem:[%s9] sm:$0x1]
    %v961 = vlaneseq
    %v962 = vshrl.u32 %v961, 7
    %v963 = vsub.s32 0, %v962
    %v964 = vrot.slane %v959, %v963
    %v982 = vunpack.c.l.b16 %v943
    %v983 = vunpack.c.l.b16 %v944
    %v984 = vunpack.c.l.b16 %v945
    %v985 = vunpack.c.l.b16 %v946
    %v986 = vunpack.c.l.b16 %v947
    %v987 = vunpack.c.l.b16 %v948
    %v988 = vunpack.c.l.b16 %v949
    %v989 = vunpack.c.l.b16 %v950
    %v990 = vunpack.c.l.b16 %v951
    %v991 = vunpack.c.l.b16 %v952
    %v992 = vunpack.c.l.b16 %v953
    %v993 = vunpack.c.l.b16 %v954
    %v994 = vunpack.c.l.b16 %v955
    %v995 = vunpack.c.l.b16 %v956
    %v996 = vunpack.c.l.b16 %v957
    %v997 = vunpack.c.l.b16 %v958
    %v998 = vpack.c.b16 %v983, %v982
    %v999 = vpack.c.b16 %v985, %v984
    %v1000 = vpack.c.b16 %v987, %v986
    %v1001 = vpack.c.b16 %v989, %v988
    %v1002 = vpack.c.b16 %v991, %v990
    %v1003 = vpack.c.b16 %v993, %v992
    %v1004 = vpack.c.b16 %v995, %v994
    %v1005 = vpack.c.b16 %v997, %v996
    %1014 = vmatprep.subr.bf16.mxu0 0
    %1015 = vmatpush1.bf16.msra.mxu0 %v998
    %1016 = vmatprep.subr.bf16.mxu0 0
    %1017 = vmatpush1.bf16.msra.mxu0 %v999
    %1018 = vmatprep.subr.bf16.mxu0 0
    %1019 = vmatpush1.bf16.msra.mxu0 %v1000
    %1020 = vmatprep.subr.bf16.mxu0 0
    %1021 = vmatpush1.bf16.msra.mxu0 %v1001
    %1022 = vmatprep.subr.bf16.mxu0 0
    %1023 = vmatpush1.bf16.msra.mxu0 %v1002
    %1024 = vmatprep.subr.bf16.mxu0 0
    %1025 = vmatpush1.bf16.msra.mxu0 %v1003
    %1026 = vmatprep.subr.bf16.mxu0 0
    %1027 = vmatpush1.bf16.msra.mxu0 %v1004
    %1028 = vmatprep.subr.bf16.mxu0 0
    %1029 = vmatpush1.bf16.msra.mxu0 %v1005
    %1030 = vmatprep.subr.bf16.mxu0 0
    %1031 = vmatpush1.bf16.msra.mxu0 0
    %1032 = vmatprep.subr.bf16.mxu0 0
    %1033 = vmatpush1.bf16.msra.mxu0 0
    %1034 = vmatprep.subr.bf16.mxu0 0
    %1035 = vmatpush1.bf16.msra.mxu0 0
    %1036 = vmatprep.subr.bf16.mxu0 0
    %1037 = vmatpush1.bf16.msra.mxu0 0
    %1038 = vmatprep.subr.bf16.mxu0 0
    %1039 = vmatpush1.bf16.msra.mxu0 0
    %1040 = vmatprep.subr.bf16.mxu0 0
    %1041 = vmatpush1.bf16.msra.mxu0 0
    %1042 = vmatprep.subr.bf16.mxu0 0
    %1043 = vmatpush1.bf16.msra.mxu0 0
    %1044 = vmatprep.subr.bf16.mxu0 0
    %1045 = vmatpush1.bf16.msra.mxu0 0
    %1046 = vmatprep.mubr.bf16.mxu0 0
    %1047 = vmatmul.mubr.bf16.gmra.mrb[0].mxu0 %v935
    %v1048 = vpop.f32.mrb[0].mxu0
    %v1049 = vadd.f32 %v964, %v1048
    %v1050 = vpop.f32.mrb[0].mxu0
    %v1051 = vpop.f32.mrb[0].mxu0
    %v1052 = vadd.f32 %v964, %v1051
    %v1053 = vpop.f32.mrb[0].mxu0
    %1054 = vmatprep.mubr.bf16.mxu0 0
    %1055 = vmatmul.mubr.bf16.gmra.mrb[0].mxu0 %v936
    %v1056 = vpop.f32.mrb[0].mxu0
    %v1057 = vadd.f32 %v964, %v1056
    %v1058 = vpop.f32.mrb[0].mxu0
    %v1059 = vpop.f32.mrb[0].mxu0
    %v1060 = vadd.f32 %v964, %v1059
    %v1061 = vpop.f32.mrb[0].mxu0
    %1062 = vmatprep.mubr.bf16.mxu0 0
    %1063 = vmatmul.mubr.bf16.gmra.mrb[0].mxu0 %v937
    %v1064 = vpop.f32.mrb[0].mxu0
    %v1065 = vadd.f32 %v964, %v1064
    %v1066 = vpop.f32.mrb[0].mxu0
    %v1067 = vpop.f32.mrb[0].mxu0
    %v1068 = vadd.f32 %v964, %v1067
    %v1069 = vpop.f32.mrb[0].mxu0
    %1070 = vmatprep.mubr.bf16.mxu0 0
    %1071 = vmatmul.mubr.bf16.gmra.mrb[0].mxu0 %v938
    %v1072 = vpop.f32.mrb[0].mxu0
    %v1073 = vadd.f32 %v964, %v1072
    %v1074 = vpop.f32.mrb[0].mxu0
    %v1075 = vpop.f32.mrb[0].mxu0
    %v1076 = vadd.f32 %v964, %v1075
    %v1077 = vpop.f32.mrb[0].mxu0
    %1078 = vmatprep.mubr.bf16.mxu0 0
    %1079 = vmatmul.mubr.bf16.gmra.mrb[0].mxu0 %v939
    %v1080 = vpop.f32.mrb[0].mxu0
    %v1081 = vadd.f32 %v964, %v1080
    %v1082 = vpop.f32.mrb[0].mxu0
    %v1083 = vpop.f32.mrb[0].mxu0
    %v1084 = vadd.f32 %v964, %v1083
    %v1085 = vpop.f32.mrb[0].mxu0
    %1086 = vmatprep.mubr.bf16.mxu0 0
    %1087 = vmatmul.mubr.bf16.gmra.mrb[0].mxu0 %v940
    %v1088 = vpop.f32.mrb[0].mxu0
    %v1089 = vadd.f32 %v964, %v1088
    %v1090 = vpop.f32.mrb[0].mxu0
    %v1091 = vpop.f32.mrb[0].mxu0
    %v1092 = vadd.f32 %v964, %v1091
    %v1093 = vpop.f32.mrb[0].mxu0
    %1094 = vmatprep.mubr.bf16.mxu0 0
    %1095 = vmatmul.mubr.bf16.gmra.mrb[0].mxu0 %v941
    %v1096 = vpop.f32.mrb[0].mxu0
    %v1097 = vadd.f32 %v964, %v1096
    %v1098 = vpop.f32.mrb[0].mxu0
    %v1099 = vpop.f32.mrb[0].mxu0
    %v1100 = vadd.f32 %v964, %v1099
    %v1101 = vpop.f32.mrb[0].mxu0
    %1102 = vmatprep.mubr.bf16.mxu0 0
    %1103 = vmatmul.mubr.bf16.gmra.mrb[0].mxu0 %v942
    %v1104 = vpop.f32.mrb[0].mxu0
    %v1105 = vadd.f32 %v964, %v1104
    %v1106 = vpop.f32.mrb[0].mxu0
    %v1107 = vpop.f32.mrb[0].mxu0
    %v1108 = vadd.f32 %v964, %v1107
    %v1109 = vpop.f32.mrb[0].mxu0
    %1110 = vdwg.mxu0
    %1111 = vst [vmem:[#allocation13] sm:$0xff] %v1049
    %1112 = vst [vmem:[#allocation13 + $0x8] sm:$0xff] %v1052
    %1113 = vst [vmem:[#allocation13 + $0x10] sm:$0xff] %v1057
    %1114 = vst [vmem:[#allocation13 + $0x18] sm:$0xff] %v1060
    %1115 = vst [vmem:[#allocation13 + $0x20] sm:$0xff] %v1065
    %1116 = vst [vmem:[#allocation13 + $0x28] sm:$0xff] %v1068
    %1117 = vst [vmem:[#allocation13 + $0x30] sm:$0xff] %v1073
    %1118 = vst [vmem:[#allocation13 + $0x38] sm:$0xff] %v1076
    %1119 = vst [vmem:[#allocation13 + $0x40] sm:$0xff] %v1081
    %1120 = vst [vmem:[#allocation13 + $0x48] sm:$0xff] %v1084
    %1121 = vst [vmem:[#allocation13 + $0x50] sm:$0xff] %v1089
    %1122 = vst [vmem:[#allocation13 + $0x58] sm:$0xff] %v1092
    %1123 = vst [vmem:[#allocation13 + $0x60] sm:$0xff] %v1097
    %1124 = vst [vmem:[#allocation13 + $0x68] sm:$0xff] %v1100
    %1125 = vst [vmem:[#allocation13 + $0x70] sm:$0xff] %v1105
    %1126 = vst [vmem:[#allocation13 + $0x78] sm:$0xff] %v1108
    // Predicated region
    $region66: #{vae_forward.1} parent=1 // pred_check
      _
    $region67: #{vae_forward.1} parent=1 // pred_check_branch
      %1128 = sbr.rel (0) target = $region69
    $region68: #{vae_forward.1} parent=1 // pred_region
      %s1130 = ssub.s32 2048, 2048
      %1131 = vsyncadd [#allocation4], %s1130
      %s1132 = sshll.u32 [#allocation13], 4
      %s1133 = int_to_ptr.vmem [resolvable:$true] %s1132
      %1138 = dma.vmem_to_hbm [thread:$0]  %s1133, 2048, %s10, [#allocation4], 128, 128, 8
    $region69: #{vae_forward.1} parent=1 // pred_fallthru
      _
    // Predicated region
    $region70: #{vae_forward.1} parent=1 // pred_check
      _
    $region71: #{vae_forward.1} parent=1 // pred_check_branch
      %1140 = sbr.rel (0) target = $region73
    $region72: #{vae_forward.1} parent=1 // pred_region
      %s1142 = ssub.s32 4096, 4096
      %1143 = vsyncadd [#allocation15], %s1142
      %s1144 = sshll.u32 [#allocation14], 4
      %s1145 = int_to_ptr.vmem [resolvable:$true] %s1144
      %1150 = dma.vmem_to_hbm [thread:$0]  %s1145, 4096, %s11, [#allocation15], 256, 256, 16
    $region73: #{vae_forward.1} parent=1 // pred_fallthru
      _
    // Predicated region
    $region74: #{vae_forward.1} parent=1 // pred_check
      _
    $region75: #{vae_forward.1} parent=1 // pred_check_branch
      %1152 = sbr.rel (0) target = $region77
    $region76: #{vae_forward.1} parent=1 // pred_region
      %1153 = dma.done [#allocation4], 2048
    $region77: #{vae_forward.1} parent=1 // pred_fallthru
      _
    // Predicated region
    $region78: #{vae_forward.1} parent=1 // pred_check
      _
    $region79: #{vae_forward.1} parent=1 // pred_check_branch
      %1155 = sbr.rel (0) target = $region81
    $region80: #{vae_forward.1} parent=1 // pred_region
      %1156 = dma.done [#allocation15], 4096
    $region81: #{vae_forward.1} parent=1 // pred_fallthru
      _
    %1157 = vsyncpa [#allocation3], 1
    %1158 = vsyncpa [#allocation6], 1
    %1159 = vsyncpa [#allocation9], 1
    %1160 = vsyncpa [#allocation12], 1
    %1161 = vsyncpa [#allocation4], 1
    %1162 = vsyncpa [#allocation15], 1

</llo_original>
